<compile_context>
chip_gen: v7x
topology: tpu7x:2x2x1
jax: 0.10.0
libtpu: 0.0.40
codegen_flags: <defaults>
</compile_context>

<pallas_src>
import functools

import jax
import jax.numpy as jnp
from jax.experimental import pallas as pl
from jax.experimental.pallas import tpu as pltpu

_LANE = 128
_VMEM_LIMIT = 32 * 1024 * 1024  # explicit scoped-VMEM budget; tiles below are
                                # small enough for v5e/v6e/v7x with headroom.


def _round_up(x, m):
    return ((x + m - 1) // m) * m


def _pick_tile(n, candidates=(512, 256, 128)):
    """Largest MXU-aligned tile that evenly divides n; fall back to the full
    extent (small problems get a single block, which Pallas allows even for
    non-(8,128)-aligned shapes)."""
    for t in candidates:
        if n >= t and n % t == 0:
            return t
    return n


# ---------------------------------------------------------------------------
# Kernels
# ---------------------------------------------------------------------------
def _xw_kernel(x_ref, w_ref, o_ref):
    # Row-tiled feature transform: o = x @ w (hoisted out of aggregation).
    o_ref[...] = jnp.dot(x_ref[...], w_ref[...],
                         preferred_element_type=jnp.float32).astype(o_ref.dtype)


def _agg_kernel(a_ref, z_ref, b_ref, o_ref, acc_ref, *, apply_relu):
    # out_rowtile = [relu]( sum_k A[i,k] @ Z[k]  + b )
    k = pl.program_id(1)

    @pl.when(k == 0)
    def _():
        acc_ref[...] = jnp.zeros_like(acc_ref)

    acc_ref[...] += jnp.dot(a_ref[...], z_ref[...],
                            preferred_element_type=jnp.float32)

    @pl.when(k == pl.num_programs(1) - 1)
    def _():
        r = acc_ref[...] + b_ref[...]
        if apply_relu:
            r = jnp.maximum(r, 0.0)
        o_ref[...] = r.astype(o_ref.dtype)


def _agg_fused_kernel(a_ref, z_ref, b_ref, w_ref, o_ref, acc_ref):
    # out_rowtile = relu( sum_k A[i,k] @ Z[k] + b ) @ W
    # (layer-1 aggregation fused with the layer-2 feature transform so the
    #  hidden activation never round-trips HBM)
    k = pl.program_id(1)

    @pl.when(k == 0)
    def _():
        acc_ref[...] = jnp.zeros_like(acc_ref)

    acc_ref[...] += jnp.dot(a_ref[...], z_ref[...],
                            preferred_element_type=jnp.float32)

    @pl.when(k == pl.num_programs(1) - 1)
    def _():
        h = jnp.maximum(acc_ref[...] + b_ref[...], 0.0)
        o_ref[...] = jnp.dot(h.astype(w_ref.dtype), w_ref[...],
                             preferred_element_type=jnp.float32
                             ).astype(o_ref.dtype)


# ---------------------------------------------------------------------------
# pallas_call wrappers
# ---------------------------------------------------------------------------
def _feature_transform(x, w, out_dtype):
    """z = x @ w, tiled over rows of x (computed exactly once)."""
    n, f_in = x.shape
    c = w.shape[1]
    tm = _pick_tile(n)
    return pl.pallas_call(
        _xw_kernel,
        out_shape=jax.ShapeDtypeStruct((n, c), out_dtype),
        grid=(n // tm,),
        in_specs=[pl.BlockSpec((tm, f_in), lambda i: (i, 0)),
                  pl.BlockSpec((f_in, c), lambda i: (0, 0))],
        out_specs=pl.BlockSpec((tm, c), lambda i: (i, 0)),
        compiler_params=pltpu.CompilerParams(
            dimension_semantics=("parallel",),
            vmem_limit_bytes=_VMEM_LIMIT),
    )(x, w)


def _aggregate(a, z, b, *, post_w=None, apply_relu=False, out_dtype):
    """out = [relu](A @ z + b) [@ post_w], tiled over (row_tile, k_tile)."""
    n = a.shape[0]
    c_in = z.shape[1]
    c_out = c_in if post_w is None else post_w.shape[1]
    tm = _pick_tile(n)
    tk = _pick_tile(n)

    a_spec = pl.BlockSpec((tm, tk), lambda i, k: (i, k))
    z_spec = pl.BlockSpec((tk, c_in), lambda i, k: (k, 0))
    b_spec = pl.BlockSpec((1, c_in), lambda i, k: (0, 0))
    o_spec = pl.BlockSpec((tm, c_out), lambda i, k: (i, 0))
    scratch = [pltpu.VMEM((tm, c_in), jnp.float32)]
    cparams = pltpu.CompilerParams(
        dimension_semantics=("parallel", "arbitrary"),
        vmem_limit_bytes=_VMEM_LIMIT)
    out_shape = jax.ShapeDtypeStruct((n, c_out), out_dtype)
    grid = (n // tm, n // tk)

    if post_w is None:
        return pl.pallas_call(
            functools.partial(_agg_kernel, apply_relu=apply_relu),
            out_shape=out_shape,
            grid=grid,
            in_specs=[a_spec, z_spec, b_spec],
            out_specs=o_spec,
            scratch_shapes=scratch,
            compiler_params=cparams,
        )(a, z, b)

    w_spec = pl.BlockSpec((c_in, c_out), lambda i, k: (0, 0))
    return pl.pallas_call(
        _agg_fused_kernel,
        out_shape=out_shape,
        grid=grid,
        in_specs=[a_spec, z_spec, b_spec, w_spec],
        out_specs=o_spec,
        scratch_shapes=scratch,
        compiler_params=cparams,
    )(a, z, b, post_w)


def gcn_forward(a_hat, x, w1, b1, w2, b2, *, agg_dtype=jnp.bfloat16):
    """out = A_hat @ (relu(A_hat @ (X @ W1) + b1) @ W2) + b2.

    `agg_dtype` is the storage dtype of the large operands (A_hat, Z, weights
    fed to the MXU); accumulation is always f32.  bfloat16 halves HBM traffic
    and uses the native bf16 MXU path on v5e/v6e/v7x.
    """
    n, f_in = x.shape
    hid = w1.shape[1]
    out_c = w2.shape[1]

    # Lane-dense zero-padding of the small feature dims (otherwise OUT=2 would
    # force masked vst.msk stores and waste 126/128 MXU result lanes).  Padded
    # columns stay exactly zero through relu; the wrapper slices them off.
    hid_pad = _round_up(hid, _LANE)
    out_pad = _round_up(out_c, _LANE)

    w1_p = jnp.zeros((f_in, hid_pad), jnp.float32).at[:, :hid].set(w1)
    b1_p = jnp.zeros((1, hid_pad), jnp.float32).at[:, :hid].set(
        b1.reshape(1, -1))
    w2_p = jnp.zeros((hid_pad, out_pad), jnp.float32).at[:hid, :out_c].set(w2)
    b2_p = jnp.zeros((1, out_pad), jnp.float32).at[:, :out_c].set(
        b2.reshape(1, -1))

    a_q = a_hat.astype(agg_dtype)

    # Layer-1 feature transform, hoisted out of the tiled aggregation loop.
    z1 = _feature_transform(x.astype(agg_dtype), w1_p.astype(agg_dtype),
                            agg_dtype)                          # [N, hid_pad]

    # TODO(synk): training-mode Dropout(0.5) between layers is not applied
    # (inference semantics: identity).

    # Layer-1 aggregation fused with the layer-2 feature transform:
    #   z2 = relu(A_hat @ z1 + b1) @ W2
    z2 = _aggregate(a_q, z1, b1_p, post_w=w2_p.astype(agg_dtype),
                    out_dtype=agg_dtype)                        # [N, out_pad]

    # Layer-2 aggregation: out = A_hat @ z2 + b2
    # TODO(synk): for real sparse graphs, drive the A_hat BlockSpec index_map
    # with PrefetchScalarGridSpec scalar prefetch to skip all-zero A tiles.
    out_padded = _aggregate(a_q, z2, b2_p, out_dtype=jnp.float32)

    return out_padded[:, :out_c]


# ---------------------------------------------------------------------------
# Graph preprocessing + pure-JAX reference
# ---------------------------------------------------------------------------
def build_normalized_adjacency(edge_index, num_nodes):
    """Dense GCN normalization: D^-1/2 (A + I) D^-1/2 with edge weight 1."""
    a = jnp.zeros((num_nodes, num_nodes), dtype=jnp.float32)
    src, dst = edge_index[0], edge_index[1]
    # undirected graph (nx.Graph): add both directions
    a = a.at[src, dst].set(1.0)
    a = a.at[dst, src].set(1.0)
    a = a + jnp.eye(num_nodes, dtype=jnp.float32)  # self-loops
    deg = jnp.sum(a, axis=1)
    d_inv_sqrt = jnp.where(deg > 0, 1.0 / jnp.sqrt(deg), 0.0)
    return d_inv_sqrt[:, None] * a * d_inv_sqrt[None, :]


def reference_forward(a_hat, x, w1, b1, w2, b2, *, agg_dtype=jnp.float32):
    """Pure-JAX reference mirroring the kernel's reduced-precision operands
    (A_hat / Z / weights rounded to agg_dtype, f32 accumulation)."""
    f32 = jnp.float32
    q = lambda t: t.astype(agg_dtype).astype(f32)
    a_q = q(a_hat)
    z1 = q(jnp.dot(q(x), q(w1)))
    h = jnp.maximum(jnp.dot(a_q, z1) + b1.reshape(1, -1), 0.0)
    z2 = q(jnp.dot(q(h), q(w2)))
    return jnp.dot(a_q, z2) + b2.reshape(1, -1)


if __name__ == "__main__":
    key = jax.random.PRNGKey(0)

    # Small synthetic graph consistent with the module's forward:
    N = 16       # nodes
    IN_C = 8     # input feature dim
    HID_C = 32   # hidden dim
    OUT_C = 2    # GCNConv(hid_c, 2)

    k_x, k_e, k_w1, k_b1, k_w2, k_b2 = jax.random.split(key, 6)

    # Node features
    x = jax.random.normal(k_x, (N, IN_C), dtype=jnp.float32)

    # Deterministic random edge list (undirected), shape [2, E]
    E = 24
    src = jax.random.randint(k_e, (E,), 0, N)
    dst = (src + 1 + jax.random.randint(jax.random.fold_in(k_e, 1),
                                        (E,), 0, N - 1)) % N
    edge_index = jnp.stack([src, dst], axis=0).astype(jnp.int32)

    a_hat = build_normalized_adjacency(edge_index, N)

    # Deterministic parameter init (glorot-ish scaling); small nonzero biases
    # so the bias path is actually exercised.
    w1 = jax.random.normal(k_w1, (IN_C, HID_C), dtype=jnp.float32) / jnp.sqrt(IN_C)
    b1 = 0.1 * jax.random.normal(k_b1, (1, HID_C), dtype=jnp.float32)
    w2 = jax.random.normal(k_w2, (HID_C, OUT_C), dtype=jnp.float32) / jnp.sqrt(HID_C)
    b2 = 0.1 * jax.random.normal(k_b2, (1, OUT_C), dtype=jnp.float32)

    out = gcn_forward(a_hat, x, w1, b1, w2, b2)     # default bf16 operands
    out = jax.block_until_ready(out)

    ref = reference_forward(a_hat, x, w1, b1, w2, b2, agg_dtype=jnp.bfloat16)
    assert out.shape == (N, OUT_C), out.shape
    assert jnp.allclose(out, ref, atol=2e-2, rtol=2e-2), (
        "mismatch vs. JAX reference: max abs err = "
        f"{jnp.max(jnp.abs(out - ref))}")

    print("KERNEL_OK")
</pallas_src>

<mosaic_0001>
module attributes {stable_mosaic.version = 11 : i64} {
  func.func @_xw_kernel(%arg0: i32, %arg1: memref<16x8xbf16, #tpu.memory_space<vmem>>, %arg2: memref<8x128xbf16, #tpu.memory_space<vmem>>, %arg3: memref<16x128xbf16, #tpu.memory_space<vmem>>) attributes {dimension_semantics = [#tpu.dimension_semantics<parallel>], iteration_bounds = array<i64: 1>, scalar_prefetch = 0 : i64, scratch_operands = 0 : i64, tpu.core_type = #tpu.core_type<tc>, window_params = [{transform_indices = @transform_0, window_bounds = array<i64: 16, 8>}, {pipeline_mode = #tpu.pipeline_mode<synchronous>, transform_indices = @transform_1, window_bounds = array<i64: 8, 128>}, {transform_indices = @transform_2, window_bounds = array<i64: 16, 128>}]} {
    %c0 = arith.constant 0 : index
    %c0_0 = arith.constant 0 : index
    %0 = vector.load %arg1[%c0, %c0_0] : memref<16x8xbf16, #tpu.memory_space<vmem>>, vector<16x8xbf16>
    %c0_1 = arith.constant 0 : index
    %c0_2 = arith.constant 0 : index
    %1 = vector.load %arg2[%c0_1, %c0_2] : memref<8x128xbf16, #tpu.memory_space<vmem>>, vector<8x128xbf16>
    %cst = arith.constant dense<0.000000e+00> : vector<16x128xf32>
    %2 = tpu.matmul %0, %1, %cst {dimension_numbers = #tpu.dot_dimension_numbers<[1], [0], [0], [1], [0, 0, 1, 1], [], []>} : vector<16x8xbf16>, vector<8x128xbf16>, vector<16x128xf32> -> vector<16x128xf32>
    %3 = arith.truncf %2 : vector<16x128xf32> to vector<16x128xbf16>
    %c0_3 = arith.constant 0 : index
    %c0_4 = arith.constant 0 : index
    %4 = vector.load %arg3[%c0_3, %c0_4] : memref<16x128xbf16, #tpu.memory_space<vmem>>, vector<16x128xbf16>
    tpu.vector_store %arg3[%c0_3, %c0_4], %3 {strides = array<i32>} : memref<16x128xbf16, #tpu.memory_space<vmem>>, vector<16x128xbf16>,
    return
  }
  func.func @transform_0(%arg0: i32) -> (i32, i32) {
    %c0_i32 = arith.constant 0 : i32
    %c0_i32_0 = arith.constant 0 : i32
    return %arg0, %c0_i32 : i32, i32
  }
  func.func @transform_1(%arg0: i32) -> (i32, i32) {
    %c0_i32 = arith.constant 0 : i32
    %c0_i32_0 = arith.constant 0 : i32
    %c0_i32_1 = arith.constant 0 : i32
    return %c0_i32, %c0_i32_0 : i32, i32
  }
  func.func @transform_2(%arg0: i32) -> (i32, i32) {
    %c0_i32 = arith.constant 0 : i32
    %c0_i32_0 = arith.constant 0 : i32
    return %arg0, %c0_i32 : i32, i32
  }
}

</mosaic_0001>

<llo_original>
// kernel: tpu_custom_call.1
$region0: #{tpu_custom_call.1}
  #allocation0 [shape = 'u32[]', space=smem, size = 0x4, offset = 0x4, fixed_abs, tag = 'smem constant byte address 0x4 - core index']
  #allocation1 [shape = 'u32[144,128]{1,0:T(1,128)}', space=vmem, size = 0x12000, scoped, tag = 'internal scratch']
  %s0 = inlined_call_operand.vmem [shape: bf16[16,8], index: 0, kind: input, shape index: {}]
  %s1 = inlined_call_operand.vmem [shape: bf16[8,128], index: 1, kind: input, shape index: {}]
  %s2 = inlined_call_operand.hbm [shape: bf16[16,128], index: 2, kind: output, shape index: {}]
  %s3 = sld [smem:[#allocation0]]
  $region18: #{tpu_custom_call.1} parent=0
    _
  %s5 = ssub.s32 1, %s3
  %s6 = scalar_select 0, %s5, %s3
  $region1: #{tpu_custom_call.1} parent=0
    #allocation2 [shape = 'u8[4096]{0}', space=vmem, size = 0x1000, scoped, tag = 'output window, operand 0, single buffered']
    #allocation3 [shape = 's32[1]{0}', space=sflag, size = 0x4, scoped, tag = 'scoped memory for tpu_custom_call.1']
    %7 = vsyncpa [#allocation3], 0
    // Predicated region
    $region2: #{tpu_custom_call.1} parent=1 // pred_check
      _
    $region3: #{tpu_custom_call.1} parent=1 // pred_check_branch
      %9 = sbr.rel (0) target = $region5
    $region4: #{tpu_custom_call.1} parent=1 // pred_region
      _
    $region5: #{tpu_custom_call.1} parent=1 // pred_fallthru
      _
    // Predicated region
    $region6: #{tpu_custom_call.1} parent=1 // pred_check
      _
    $region7: #{tpu_custom_call.1} parent=1 // pred_check_branch
      %11 = sbr.rel (0) target = $region9
    $region8: #{tpu_custom_call.1} parent=1 // pred_region
      _
    $region9: #{tpu_custom_call.1} parent=1 // pred_fallthru
      _
    %v13 = vld [vmem:[%s0] sm:$0xf]
    %v14 = vld [vmem:[%s0 + $0x4] sm:$0xf]
    %v15 = vld [vmem:[%s1] sm:$0xf]
    %v18 = vunpack.c.l.b16 %v13
    %v19 = vunpack.c.l.b16 %v14
    %v20 = vpack.c.b16 %v19, %v18
    %vm21 = vcmask 64512
    %v23 = vsel %vm21, %v20, 0
    %vm25 = vcmask 1043456
    %v27 = vsel %vm25, %v15, 0
    %29 = vmatprep.subr.bf16.mxu0 0
    %30 = vmatpush1.bf16.msra.mxu0 %v27
    %31 = vmatprep.subr.bf16.mxu0 0
    %32 = vmatpush1.bf16.msra.mxu0 0
    %33 = vmatprep.subr.bf16.mxu0 0
    %34 = vmatpush1.bf16.msra.mxu0 0
    %35 = vmatprep.subr.bf16.mxu0 0
    %36 = vmatpush1.bf16.msra.mxu0 0
    %37 = vmatprep.subr.bf16.mxu0 0
    %38 = vmatpush1.bf16.msra.mxu0 0
    %39 = vmatprep.subr.bf16.mxu0 0
    %40 = vmatpush1.bf16.msra.mxu0 0
    %41 = vmatprep.subr.bf16.mxu0 0
    %42 = vmatpush1.bf16.msra.mxu0 0
    %43 = vmatprep.subr.bf16.mxu0 0
    %44 = vmatpush1.bf16.msra.mxu0 0
    %45 = vmatprep.subr.bf16.mxu0 0
    %46 = vmatpush1.bf16.msra.mxu0 0
    %47 = vmatprep.subr.bf16.mxu0 0
    %48 = vmatpush1.bf16.msra.mxu0 0
    %49 = vmatprep.subr.bf16.mxu0 0
    %50 = vmatpush1.bf16.msra.mxu0 0
    %51 = vmatprep.subr.bf16.mxu0 0
    %52 = vmatpush1.bf16.msra.mxu0 0
    %53 = vmatprep.subr.bf16.mxu0 0
    %54 = vmatpush1.bf16.msra.mxu0 0
    %55 = vmatprep.subr.bf16.mxu0 0
    %56 = vmatpush1.bf16.msra.mxu0 0
    %57 = vmatprep.subr.bf16.mxu0 0
    %58 = vmatpush1.bf16.msra.mxu0 0
    %59 = vmatprep.subr.bf16.mxu0 0
    %60 = vmatpush1.bf16.msra.mxu0 0
    %61 = vmatprep.mubr.bf16.mxu0 0
    %62 = vmatmul.mubr.bf16.gmra.mrb[0].mxu0 %v23
    %v63 = vpop.f32.mrb[0].mxu0
    %v64 = vadd.f32 0.0, %v63
    %v65 = vpop.f32.mrb[0].mxu0
    %v66 = vpop.f32.mrb[0].mxu0
    %v67 = vadd.f32 0.0, %v66
    %v68 = vpop.f32.mrb[0].mxu0
    %69 = vdwg.mxu0
    %v70 = vpack.c.bf16 %v67, %v64
    %v72 = vunpack.c.l.b16 %v70
    %v73 = vunpack.c.h.b16 %v70
    %v74 = vpack.c.b16 %v72, %v72
    %v75 = vpack.c.b16 %v73, %v73
    %78 = vst [vmem:[#allocation2] sm:$0xf] %v74
    %79 = vst [vmem:[#allocation2 + $0x4] sm:$0xf] %v75
    // Predicated region
    $region10: #{tpu_custom_call.1} parent=1 // pred_check
      _
    $region11: #{tpu_custom_call.1} parent=1 // pred_check_branch
      %81 = sbr.rel (0) target = $region13
    $region12: #{tpu_custom_call.1} parent=1 // pred_region
      %s83 = ssub.s32 128, 128
      %84 = vsyncadd [#allocation3], %s83
      %s85 = sshll.u32 [#allocation2], 4
      %s86 = int_to_ptr.vmem [resolvable:$true] %s85
      %91 = dma.vmem_to_hbm [thread:$0]  %s86, 128, %s2, [#allocation3], 64, 64, 4
    $region13: #{tpu_custom_call.1} parent=1 // pred_fallthru
      _
    // Predicated region
    $region14: #{tpu_custom_call.1} parent=1 // pred_check
      _
    $region15: #{tpu_custom_call.1} parent=1 // pred_check_branch
      %93 = sbr.rel (0) target = $region17
    $region16: #{tpu_custom_call.1} parent=1 // pred_region
      %94 = dma.done [#allocation3], 128
    $region17: #{tpu_custom_call.1} parent=1 // pred_fallthru
      _
    %95 = vsyncpa [#allocation3], 1

</llo_original>
